<compile_context>
chip_gen: v7x
topology: tpu7x:2x2x1
jax: 0.10.0
libtpu: 0.0.40
codegen_flags: <defaults>
</compile_context>

<pallas_src>
import functools

import jax
import jax.numpy as jnp
from jax.experimental import pallas as pl
from jax.experimental.pallas import tpu as pltpu


# ---------------------------------------------------------------------------
# small helpers
# ---------------------------------------------------------------------------
def _round_up(x, m):
    return ((x + m - 1) // m) * m


@functools.lru_cache(maxsize=1)
def _hw_info():
    """(device_kind, vmem budget for tile sizing, cap for vmem_limit_bytes)."""
    kind = ""
    try:
        kind = jax.devices()[0].device_kind.lower()
    except Exception:
        pass
    vmem_cap = None
    try:
        vmem_cap = int(pltpu.get_tpu_info().vmem_capacity_bytes)
    except Exception:
        pass
    if vmem_cap is None:
        vmem_cap = (64 << 20) if "v7" in kind else (128 << 20)
    if vmem_cap >= (100 << 20):        # v5e / v6e: 128 MiB physical VMEM
        return kind, 96 << 20, 100 << 20
    return kind, 44 << 20, 48 << 20    # v7x: 64 MiB, leave Mosaic headroom


def _vmem_limit(est_bytes, limit_cap):
    return int(min(max(int(est_bytes * 1.3) + (2 << 20), 32 << 20), limit_cap))


def _pick_divisor_tile(dim, cap, align=128):
    """Largest multiple of `align` that divides `dim` and is <= cap."""
    cap = max(align, min(cap, dim))
    best, t = align, align
    while t <= cap:
        if dim % t == 0:
            best = t
        t += align
    return best


# ---------------------------------------------------------------------------
# Fused pipeline kernel: all stages in one launch, activation stays in VMEM.
#   grid = (M tiles, num_stages); stage axis is "arbitrary" (sequential); the
#   x / output block indices are invariant over the stage axis so both stay
#   resident across stages.  `resident=True` keeps the whole weight stack in
#   VMEM (stage-invariant full block); otherwise one stage weight is streamed
#   per grid step.
# ---------------------------------------------------------------------------
def _fused_pipeline_kernel(x_ref, w_ref, b_ref, o_ref, act_ref, *, resident):
    s = pl.program_id(1)
    last = pl.num_programs(1) - 1

    @pl.when(s == 0)
    def _():
        act_ref[...] = x_ref[...].astype(act_ref.dtype)

    if resident:
        w = w_ref[s]          # (H, H) slice of the resident (S, H, H) stack
        b = b_ref[s]          # (1, H)
    else:
        w = w_ref[...]        # streamed (H, H) block of stage s
        b = b_ref[...]        # (1, H)

    y = jnp.dot(act_ref[...], w, preferred_element_type=jnp.float32)
    y = jnp.maximum(y + b.astype(jnp.float32), 0.0)

    @pl.when(s == last)
    def _():
        o_ref[...] = y.astype(o_ref.dtype)

    @pl.when(s < last)
    def _():
        # Single cast per stage (scratch holds the compute dtype, e.g. bf16).
        act_ref[...] = y.astype(act_ref.dtype)


@functools.partial(jax.jit, static_argnames=("tm", "resident", "vmem_limit"))
def _fused_pipeline(x, w_stack, b_stack, *, tm, resident, vmem_limit):
    """x: (M, Hin); w_stack: (S, H, H) compute dtype; b_stack: (S, 1, H) f32."""
    M, Hin = x.shape
    S, H, _ = w_stack.shape
    out_dtype = x.dtype
    Mp = _round_up(M, tm)
    xp = x
    if Mp != M or Hin != H:
        xp = jnp.pad(x, ((0, Mp - M), (0, H - Hin)))
    xp = xp.astype(w_stack.dtype)     # cast x once in the wrapper (halves x DMA)

    if resident:
        w_spec = pl.BlockSpec((S, H, H), lambda i, s: (0, 0, 0))   # loaded once
        b_spec = pl.BlockSpec((S, 1, H), lambda i, s: (0, 0, 0))
    else:
        w_spec = pl.BlockSpec((None, H, H), lambda i, s: (s, 0, 0))  # per stage
        b_spec = pl.BlockSpec((None, 1, H), lambda i, s: (s, 0, 0))

    out = pl.pallas_call(
        functools.partial(_fused_pipeline_kernel, resident=resident),
        out_shape=jax.ShapeDtypeStruct((Mp, H), out_dtype),
        grid_spec=pltpu.PrefetchScalarGridSpec(
            num_scalar_prefetch=0,
            grid=(Mp // tm, S),
            in_specs=[
                pl.BlockSpec((tm, H), lambda i, s: (i, 0)),   # fetched once per i
                w_spec,
                b_spec,
            ],
            out_specs=pl.BlockSpec((tm, H), lambda i, s: (i, 0)),
            scratch_shapes=[pltpu.VMEM((tm, H), w_stack.dtype)],  # compute dtype
        ),
        compiler_params=pltpu.CompilerParams(
            dimension_semantics=("parallel", "arbitrary"),
            vmem_limit_bytes=vmem_limit,
        ),
    )(xp, w_stack, b_stack)
    return out[:M] if Mp != M else out


def _choose_fused_tm(M, H, w_vmem_bytes, c_itemsize, io_itemsize, budget, kind):
    # v5e roofline knee is ~240 rows; v6e/v7x need much larger tm to hide
    # weight DMA behind the MXU when weights are streamed.
    cap = 256 if "v5" in kind else 1024
    tm = min(_round_up(M, 8), cap)
    if "v7" in kind and M > 8:
        # v7x has 2 TensorCores: keep >=2 tiles on the parallel M axis.
        tm = min(tm, max(8, _round_up(-(-M // 2), 8)))
    while True:
        act_bytes = tm * H * (2 * c_itemsize      # x block, double-buffered
                              + 2 * io_itemsize   # output block, double-buffered
                              + c_itemsize        # activation scratch
                              + 4)                # f32 matmul temporary
        if w_vmem_bytes + act_bytes <= budget or tm <= 8:
            break
        tm = max(8, _round_up(tm // 2, 8))
    return tm


# ---------------------------------------------------------------------------
# Generic single-stage kernels (fallback when stage widths are too
# non-uniform to pad-fuse).  Weights/bias are pre-padded + pre-cast once in
# __init__; only the activation flows through here.
# ---------------------------------------------------------------------------
def _stage_kernel_single_k(x_ref, w_ref, b_ref, o_ref):
    y = jnp.dot(x_ref[...], w_ref[...], preferred_element_type=jnp.float32)
    o_ref[...] = jnp.maximum(y + b_ref[...].astype(jnp.float32), 0.0).astype(o_ref.dtype)


def _stage_kernel_multi_k(x_ref, w_ref, b_ref, o_ref, acc_ref):
    k = pl.program_id(2)

    @pl.when(k == 0)
    def _():
        acc_ref[...] = jnp.zeros_like(acc_ref)

    acc_ref[...] += jnp.dot(x_ref[...], w_ref[...], preferred_element_type=jnp.float32)

    @pl.when(k == pl.num_programs(2) - 1)
    def _():
        o_ref[...] = jnp.maximum(
            acc_ref[...] + b_ref[...].astype(jnp.float32), 0.0
        ).astype(o_ref.dtype)


@functools.partial(jax.jit, static_argnames=("tm", "tn", "tk", "vmem_limit"))
def _stage_forward_padded(xp, wp, bp, *, tm, tn, tk, vmem_limit):
    """One stage on pre-padded operands: relu(xp @ wp + bp), all 128-aligned."""
    Mp, Kp = xp.shape
    _, Np = wp.shape
    if Kp == tk:
        # K resident: no reduction grid axis, no accumulator scratch.
        return pl.pallas_call(
            _stage_kernel_single_k,
            out_shape=jax.ShapeDtypeStruct((Mp, Np), xp.dtype),
            grid_spec=pltpu.PrefetchScalarGridSpec(
                num_scalar_prefetch=0,
                grid=(Mp // tm, Np // tn),
                in_specs=[
                    pl.BlockSpec((tm, Kp), lambda i, j: (i, 0)),
                    pl.BlockSpec((Kp, tn), lambda i, j: (0, j)),
                    pl.BlockSpec((1, tn), lambda i, j: (0, j)),
                ],
                out_specs=pl.BlockSpec((tm, tn), lambda i, j: (i, j)),
            ),
            compiler_params=pltpu.CompilerParams(
                dimension_semantics=("parallel", "parallel"),
                vmem_limit_bytes=vmem_limit,
            ),
        )(xp, wp, bp)
    return pl.pallas_call(
        _stage_kernel_multi_k,
        out_shape=jax.ShapeDtypeStruct((Mp, Np), xp.dtype),
        grid_spec=pltpu.PrefetchScalarGridSpec(
            num_scalar_prefetch=0,
            grid=(Mp // tm, Np // tn, Kp // tk),
            in_specs=[
                pl.BlockSpec((tm, tk), lambda i, j, k: (i, k)),
                pl.BlockSpec((tk, tn), lambda i, j, k: (k, j)),
                pl.BlockSpec((1, tn), lambda i, j, k: (0, j)),
            ],
            out_specs=pl.BlockSpec((tm, tn), lambda i, j, k: (i, j)),
            scratch_shapes=[pltpu.VMEM((tm, tn), jnp.float32)],
        ),
        compiler_params=pltpu.CompilerParams(
            dimension_semantics=("parallel", "parallel", "arbitrary"),
            vmem_limit_bytes=vmem_limit,
        ),
    )(xp, wp, bp)


# ---------------------------------------------------------------------------
# Runner glue (mirrors PipeGraphRunner's orchestration, in plain Python/JAX)
# ---------------------------------------------------------------------------
class PipeTensor:
    """Placeholder handle tagged with its micro-batch number (as in PyTorch).
    The pipeline output is materialized lazily when `.value` is read."""

    def __init__(self, runner, batch_no):
        self.batch_no = batch_no
        self._runner = runner
        self._value = None

    @property
    def value(self):
        if self._value is None:
            self._runner._flush()
        return self._value


class PipeGraphRunner:
    """JAX/Pallas analogue of pfeife's PipeGraphRunner.

    Workers are modeled as a list of per-stage (W, b) parameters; the
    partition graph is a linear chain of stages.  Like the original,
    `forward` returns placeholder PipeTensors immediately; the actual compute
    is launched once all `batch_cnt` micro-batches have been loaded (or a
    result is demanded), with micro-batches stacked along M in a single
    fused-pipeline Pallas launch.
    """

    def __init__(self, stage_params, batch_cnt, compute_dtype=jnp.bfloat16):
        # TODO(synk): fx graph partitioning, mp.spawn reducer processes,
        # schedulers and device benchmarking are host-side orchestration with
        # no tensor compute; only the per-stage graph execution is kernelized.
        self.compute_dtype = jnp.dtype(compute_dtype)
        self.batch_cnt = batch_cnt
        self.batch_no = 0
        self.output_cnt = 1
        self._pending = []

        params = [(jnp.asarray(w), jnp.asarray(b)) for w, b in stage_params]
        self.stage_params = params
        self.partition_graph = list(range(len(params)))  # linear chain
        S = len(params)
        self._out_width = int(params[-1][0].shape[1])

        kind, budget, limit_cap = _hw_info()
        self._kind, self._budget, self._limit_cap = kind, budget, limit_cap
        c_item = self.compute_dtype.itemsize

        # --- fused-chain configuration: pad every stage to a square Hmax ---
        Hmax = _round_up(
            max(max(int(w.shape[0]), int(w.shape[1])) for w, _ in params), 128)
        useful = sum(int(w.shape[0]) * int(w.shape[1]) for w, _ in params)
        waste = (S * Hmax * Hmax) / max(useful, 1)
        streamed_bytes = 2 * Hmax * Hmax * c_item + 2 * Hmax * 4
        resident_bytes = 2 * S * Hmax * Hmax * c_item + 2 * S * Hmax * 4

        self._fused = (waste <= 2.0 + 1e-6) and (streamed_bytes <= budget // 2)
        if self._fused:
            self._Hmax = Hmax
            self._resident = resident_bytes <= int(budget * 0.6)
            self._w_vmem_bytes = resident_bytes if self._resident else streamed_bytes
            ws, bs = [], []
            for w, b in params:
                wp = jnp.zeros((Hmax, Hmax), self.compute_dtype)
                wp = wp.at[: w.shape[0], : w.shape[1]].set(w.astype(self.compute_dtype))
                bp = jnp.zeros((1, Hmax), jnp.float32)
                bp = bp.at[:, : b.shape[1]].set(b.astype(jnp.float32))
                ws.append(wp)
                bs.append(bp)
            self._w_stack = jnp.stack(ws)   # (S, Hmax, Hmax) compute dtype
            self._b_stack = jnp.stack(bs)   # (S, 1, Hmax) f32
        else:
            # Per-stage fallback: pre-pad + pre-cast static weights ONCE here.
            self._fallback = []
            for w, b in params:
                K, N = int(w.shape[0]), int(w.shape[1])
                Kp, Np = _round_up(K, 128), _round_up(N, 128)
                wp = jnp.zeros((Kp, Np), self.compute_dtype)
                wp = wp.at[:K, :N].set(w.astype(self.compute_dtype))
                bp = jnp.zeros((1, Np), jnp.float32)
                bp = bp.at[:, :N].set(b.astype(jnp.float32))
                tk = _pick_divisor_tile(Kp, 2048)
                tn = _pick_divisor_tile(Np, 512)
                self._fallback.append((wp, bp, tk, tn))

    def reset(self):
        self._flush()
        self.batch_no = 0

    # "load_input": queue the placed input for stage 0 of this micro-batch.
    def forward(self, *args):
        batch_no = self.batch_no
        self.batch_no += 1
        x = jnp.asarray(args[0])
        outs = [PipeTensor(self, batch_no) for _ in range(self.output_cnt)]
        self._pending.append((x, outs))
        if len(self._pending) >= self.batch_cnt:
            self._flush()
        return outs

    __call__ = forward

    def _flush(self):
        if not self._pending:
            return
        pending, self._pending = self._pending, []
        xs = [x for x, _ in pending]
        rows = [int(x.shape[0]) for x in xs]
        x_all = xs[0] if len(xs) == 1 else jnp.concatenate(xs, axis=0)
        y_all = self._run_pipeline(x_all)
        off = 0
        for (_, outs), r in zip(pending, rows):
            y = y_all[off:off + r]
            off += r
            for t in outs:
                t._value = y

    def _run_pipeline(self, x):
        if self._fused:
            M = int(x.shape[0])
            c_item = self.compute_dtype.itemsize
            tm = _choose_fused_tm(M, self._Hmax, self._w_vmem_bytes,
                                  c_item, x.dtype.itemsize,
                                  self._budget, self._kind)
            est = (self._w_vmem_bytes
                   + tm * self._Hmax * (3 * c_item + 2 * x.dtype.itemsize + 4))
            out = _fused_pipeline(
                x, self._w_stack, self._b_stack,
                tm=tm, resident=self._resident,
                vmem_limit=_vmem_limit(est, self._limit_cap))
            return out[:, : self._out_width]
        return self._run_fallback(x)

    def _run_fallback(self, x):
        M = int(x.shape[0])
        orig_dtype = x.dtype
        c_item = self.compute_dtype.itemsize
        tm = min(_round_up(M, 8), 256 if "v5" in self._kind else 512)
        Mp = _round_up(M, tm)
        Kp0 = int(self._fallback[0][0].shape[0])
        xp = jnp.pad(x, ((0, Mp - M), (0, Kp0 - int(x.shape[1]))))
        xp = xp.astype(self.compute_dtype)
        for wp, bp, tk, tn in self._fallback:
            Kp, Np = int(wp.shape[0]), int(wp.shape[1])

            def est(tk_, tn_):
                return (2 * (tm * tk_ + tk_ * tn_) * c_item + 2 * tn_ * 4
                        + tm * tn_ * 4 + 2 * tm * tn_ * c_item)

            while est(tk, tn) > self._budget and tk > 128:
                tk = _pick_divisor_tile(Kp, tk // 2)
            while est(tk, tn) > self._budget and tn > 128:
                tn = _pick_divisor_tile(Np, tn // 2)
            xp = _stage_forward_padded(
                xp, wp, bp, tm=tm, tn=tn, tk=tk,
                vmem_limit=_vmem_limit(est(tk, tn), self._limit_cap))
        return xp[:M, : self._out_width].astype(orig_dtype)


# ---------------------------------------------------------------------------
# Pure-JAX reference for correctness checking
# ---------------------------------------------------------------------------
def _ref_pipeline(x, stage_params):
    for w, b in stage_params:
        x = jnp.maximum(jnp.dot(x, w) + b, 0.0)
    return x


if __name__ == "__main__":
    key = jax.random.PRNGKey(0)

    batch = 8        # rows per micro-batch (sublane-aligned)
    hidden = 128     # hidden width (lane-aligned)
    num_stages = 3   # number of "workers" / pipeline stages
    batch_cnt = 2    # micro-batch count

    # Deterministic per-stage parameters (synthetic, no checkpoint load).
    stage_params = []
    for _ in range(num_stages):
        key, kw, kb = jax.random.split(key, 3)
        w = jax.random.normal(kw, (hidden, hidden), jnp.float32) * 0.05
        b = jax.random.normal(kb, (1, hidden), jnp.float32) * 0.1
        stage_params.append((w, b))

    key, kx = jax.random.split(key)
    micro_batches = [
        jax.random.normal(jax.random.fold_in(kx, i), (batch, hidden), jnp.float32)
        for i in range(batch_cnt)
    ]

    # --- 1) default (bf16 compute) fused pipeline, resident weights ---------
    runner_bf16 = PipeGraphRunner(stage_params, batch_cnt)            # bf16 default
    outs_bf16 = [runner_bf16(x)[0] for x in micro_batches]

    # --- 2) f32 compute fused pipeline (tight-tolerance correctness check) --
    runner_f32 = PipeGraphRunner(stage_params, batch_cnt, compute_dtype=jnp.float32)
    outs_f32 = [runner_f32(x)[0] for x in micro_batches]

    for i, x in enumerate(micro_batches):
        want = _ref_pipeline(x, stage_params)
        got32 = jax.block_until_ready(outs_f32[i].value)
        got16 = jax.block_until_ready(outs_bf16[i].value)
        assert outs_f32[i].batch_no == i and outs_bf16[i].batch_no == i
        assert got32.shape == (batch, hidden)
        assert jnp.allclose(got32, want, atol=1e-4, rtol=1e-4), (
            f"f32 fused mismatch on micro-batch {i}")
        # bf16 weights/activations quantize the inter-stage activation; the
        # math is the same, only the precision differs.
        assert jnp.allclose(got16, want, atol=5e-2, rtol=5e-2), (
            f"bf16 fused mismatch on micro-batch {i}")

    # --- 3) non-uniform widths, pad-fused path (128 -> 256 -> 128) ----------
    key, k1, k2, kb1, kb2, kx2 = jax.random.split(key, 6)
    stage_params2 = [
        (jax.random.normal(k1, (hidden, 256), jnp.float32) * 0.05,
         jax.random.normal(kb1, (1, 256), jnp.float32) * 0.1),
        (jax.random.normal(k2, (256, hidden), jnp.float32) * 0.05,
         jax.random.normal(kb2, (1, hidden), jnp.float32) * 0.1),
    ]
    runner2 = PipeGraphRunner(stage_params2, batch_cnt=1, compute_dtype=jnp.float32)
    x2 = jax.random.normal(kx2, (batch, hidden), jnp.float32)
    (out2,) = runner2(x2)
    got2 = jax.block_until_ready(out2.value)
    want2 = _ref_pipeline(x2, stage_params2)
    assert out2.batch_no == 0 and got2.shape == (batch, hidden)
    assert jnp.allclose(got2, want2, atol=1e-4, rtol=1e-4), "pad-fused mismatch"

    # --- 4) strongly non-uniform widths -> per-stage fallback (128->512->128)
    key, k3, k4, kb3, kb4, kx3 = jax.random.split(key, 6)
    stage_params3 = [
        (jax.random.normal(k3, (hidden, 512), jnp.float32) * 0.05,
         jax.random.normal(kb3, (1, 512), jnp.float32) * 0.1),
        (jax.random.normal(k4, (512, hidden), jnp.float32) * 0.05,
         jax.random.normal(kb4, (1, hidden), jnp.float32) * 0.1),
    ]
    runner3 = PipeGraphRunner(stage_params3, batch_cnt=1, compute_dtype=jnp.float32)
    x3 = jax.random.normal(kx3, (batch, hidden), jnp.float32)
    (out3,) = runner3(x3)
    got3 = jax.block_until_ready(out3.value)
    want3 = _ref_pipeline(x3, stage_params3)
    assert out3.batch_no == 0 and got3.shape == (batch, hidden)
    assert jnp.allclose(got3, want3, atol=1e-4, rtol=1e-4), "fallback mismatch"

    print("KERNEL_OK")
</pallas_src>

<mosaic_0001>
module attributes {stable_mosaic.version = 11 : i64} {
  func.func @_fused_pipeline_kernel(%arg0: i32, %arg1: i32, %arg2: memref<16x128xbf16, #tpu.memory_space<vmem>>, %arg3: memref<3x128x128xbf16, #tpu.memory_space<vmem>>, %arg4: memref<3x1x128xf32, #tpu.memory_space<vmem>>, %arg5: memref<16x128xf32, #tpu.memory_space<vmem>>, %arg6: memref<16x128xbf16, #tpu.memory_space<vmem>>) attributes {dimension_semantics = [#tpu.dimension_semantics<parallel>, #tpu.dimension_semantics<arbitrary>], iteration_bounds = array<i64: 1, 3>, scalar_prefetch = 0 : i64, scratch_operands = 1 : i64, tpu.core_type = #tpu.core_type<tc>, window_params = [{transform_indices = @transform_0, window_bounds = array<i64: 16, 128>}, {pipeline_mode = #tpu.pipeline_mode<synchronous>, transform_indices = @transform_1, window_bounds = array<i64: 3, 128, 128>}, {pipeline_mode = #tpu.pipeline_mode<synchronous>, transform_indices = @transform_2, window_bounds = array<i64: 3, 1, 128>}, {transform_indices = @transform_3, window_bounds = array<i64: 16, 128>}]} {
    %c0_i32 = arith.constant 0 : i32
    %0 = arith.cmpi eq, %arg1, %c0_i32 : i32
    %1 = arith.extui %0 : i1 to i32
    %c0_i32_0 = arith.constant 0 : i32
    %2 = arith.cmpi ne, %1, %c0_i32_0 : i32
    scf.if %2 {
      %c0_10 = arith.constant 0 : index
      %c0_11 = arith.constant 0 : index
      %21 = vector.load %arg2[%c0_10, %c0_11] : memref<16x128xbf16, #tpu.memory_space<vmem>>, vector<16x128xbf16>
      %c0_12 = arith.constant 0 : index
      %c0_13 = arith.constant 0 : index
      %22 = vector.load %arg6[%c0_12, %c0_13] : memref<16x128xbf16, #tpu.memory_space<vmem>>, vector<16x128xbf16>
      tpu.vector_store %arg6[%c0_12, %c0_13], %21 {strides = array<i32>} : memref<16x128xbf16, #tpu.memory_space<vmem>>, vector<16x128xbf16>,
    } else {
    }
    %3 = arith.index_cast %arg1 : i32 to index
    %c0 = arith.constant 0 : index
    %c0_1 = arith.constant 0 : index
    %4 = vector.load %arg3[%3, %c0, %c0_1] : memref<3x128x128xbf16, #tpu.memory_space<vmem>>, vector<1x128x128xbf16>
    %5 = vector.shape_cast %4 : vector<1x128x128xbf16> to vector<128x128xbf16>
    %6 = arith.index_cast %arg1 : i32 to index
    %c0_2 = arith.constant 0 : index
    %c0_3 = arith.constant 0 : index
    %7 = vector.load %arg4[%6, %c0_2, %c0_3] : memref<3x1x128xf32, #tpu.memory_space<vmem>>, vector<1x1x128xf32>
    %8 = vector.shape_cast %7 : vector<1x1x128xf32> to vector<1x128xf32>
    %c0_4 = arith.constant 0 : index
    %c0_5 = arith.constant 0 : index
    %9 = vector.load %arg6[%c0_4, %c0_5] : memref<16x128xbf16, #tpu.memory_space<vmem>>, vector<16x128xbf16>
    %cst = arith.constant dense<0.000000e+00> : vector<16x128xf32>
    %10 = tpu.matmul %9, %5, %cst {dimension_numbers = #tpu.dot_dimension_numbers<[1], [0], [0], [1], [0, 0, 1, 1], [], []>} : vector<16x128xbf16>, vector<128x128xbf16>, vector<16x128xf32> -> vector<16x128xf32>
    %11 = vector.broadcast %8 : vector<1x128xf32> to vector<16x128xf32>
    %12 = arith.addf %10, %11 : vector<16x128xf32>
    %cst_6 = arith.constant 0.000000e+00 : f32
    %13 = vector.broadcast %cst_6 : f32 to vector<16x128xf32>
    %14 = arith.maximumf %12, %13 : vector<16x128xf32>
    %c2_i32 = arith.constant 2 : i32
    %15 = arith.cmpi eq, %arg1, %c2_i32 : i32
    %16 = arith.extui %15 : i1 to i32
    %c0_i32_7 = arith.constant 0 : i32
    %17 = arith.cmpi ne, %16, %c0_i32_7 : i32
    scf.if %17 {
      %c0_10 = arith.constant 0 : index
      %c0_11 = arith.constant 0 : index
      %21 = vector.load %arg5[%c0_10, %c0_11] : memref<16x128xf32, #tpu.memory_space<vmem>>, vector<16x128xf32>
      tpu.vector_store %arg5[%c0_10, %c0_11], %14 {strides = array<i32>} : memref<16x128xf32, #tpu.memory_space<vmem>>, vector<16x128xf32>,
    } else {
    }
    %c2_i32_8 = arith.constant 2 : i32
    %18 = arith.cmpi slt, %arg1, %c2_i32_8 : i32
    %19 = arith.extui %18 : i1 to i32
    %c0_i32_9 = arith.constant 0 : i32
    %20 = arith.cmpi ne, %19, %c0_i32_9 : i32
    scf.if %20 {
      %21 = arith.truncf %14 : vector<16x128xf32> to vector<16x128xbf16>
      %c0_10 = arith.constant 0 : index
      %c0_11 = arith.constant 0 : index
      %22 = vector.load %arg6[%c0_10, %c0_11] : memref<16x128xbf16, #tpu.memory_space<vmem>>, vector<16x128xbf16>
      tpu.vector_store %arg6[%c0_10, %c0_11], %21 {strides = array<i32>} : memref<16x128xbf16, #tpu.memory_space<vmem>>, vector<16x128xbf16>,
    } else {
    }
    return
  }
  func.func @transform_0(%arg0: i32, %arg1: i32) -> (i32, i32) {
    %c0_i32 = arith.constant 0 : i32
    %c0_i32_0 = arith.constant 0 : i32
    return %arg0, %c0_i32 : i32, i32
  }
  func.func @transform_1(%arg0: i32, %arg1: i32) -> (i32, i32, i32) {
    %c0_i32 = arith.constant 0 : i32
    %c0_i32_0 = arith.constant 0 : i32
    %c0_i32_1 = arith.constant 0 : i32
    %c0_i32_2 = arith.constant 0 : i32
    return %c0_i32, %c0_i32_0, %c0_i32_1 : i32, i32, i32
  }
  func.func @transform_2(%arg0: i32, %arg1: i32) -> (i32, i32, i32) {
    %c0_i32 = arith.constant 0 : i32
    %c0_i32_0 = arith.constant 0 : i32
    %c0_i32_1 = arith.constant 0 : i32
    %c0_i32_2 = arith.constant 0 : i32
    return %c0_i32, %c0_i32_0, %c0_i32_1 : i32, i32, i32
  }
  func.func @transform_3(%arg0: i32, %arg1: i32) -> (i32, i32) {
    %c0_i32 = arith.constant 0 : i32
    %c0_i32_0 = arith.constant 0 : i32
    return %arg0, %c0_i32 : i32, i32
  }
}

</mosaic_0001>

<llo_original>
// kernel: _fused_pipeline.1
$region0: #{_fused_pipeline.1}
  #allocation0 [shape = 'u32[]', space=smem, size = 0x4, offset = 0x4, fixed_abs, tag = 'smem constant byte address 0x4 - core index']
  #allocation1 [shape = 'u32[144,128]{1,0:T(1,128)}', space=vmem, size = 0x12000, scoped, tag = 'internal scratch']
  #allocation2 [shape = 'bf16[16,128]{1,0:T(16,128)(2,1)}', space=vmem, size = 0x1000, scoped, tag = 'scratch operand']
  %s0 = inlined_call_operand.vmem [shape: bf16[16,128], index: 0, kind: input, shape index: {}]
  %s1 = inlined_call_operand.hbm [shape: bf16[3,128,128], index: 1, kind: input, shape index: {}]
  %s2 = inlined_call_operand.vmem [shape: f32[3,1,128], index: 2, kind: input, shape index: {}]
  %s3 = inlined_call_operand.hbm [shape: f32[16,128], index: 3, kind: output, shape index: {}]
  %s4 = sld [smem:[#allocation0]]
  $region61: #{_fused_pipeline.1} parent=0
    _
  %s6 = ssub.s32 1, %s4
  %s7 = scalar_select 0, %s6, %s4
  $region1: #{_fused_pipeline.1} parent=0
    #allocation3 [shape = 'u8[98304]{0}', space=vmem, size = 0x18000, scoped, tag = 'input window, operand 1, single buffered']
    #allocation4 [shape = 's32[2]{0}', space=sflag, size = 0x8, scoped, tag = 'scoped memory for _fused_pipeline.1']
    #allocation5 [shape = 's32[2]{0}', space=sflag, size = 0x8, scoped, tag = 'scoped memory for _fused_pipeline.1']
    #allocation6 [shape = 'u8[8192]{0}', space=vmem, size = 0x2000, scoped, tag = 'output window, operand 0, single buffered']
    %8 = vsyncpa [#allocation4], 0
    %9 = vsyncpa [#allocation5], 0
    loop: start=0, step=1, limit=5
    $region2: #{_fused_pipeline.1} parent=1 // loop_pre_header
      _
    $region3: #{_fused_pipeline.1} parent=1 // loop_header
      %s11 = sphi 0, %s15
      %p12 = scmp.ge.s32.totalorder %s11, 5
      %s18 = sphi 0, %s30
      %s19 = sphi 0, %s26
      %s20 = sphi 0, %s18
      %s21 = sphi 0, %s19
      %s22 = sphi 0, %s20
      %s23 = sphi 0, %s21
      %s33 = sphi 0, %s35
      %s36 = sphi 0, %s33
      %s37 = sphi 0, %s36
      %s53 = sphi 0, %s37
      %s57 = sphi 0, %s57
      %s59 = sphi 0, %s57
      %s60 = sphi 0, %s59
      %s74 = sphi 0, %s60
      %s78 = sphi 0, %s78
      %s80 = sphi 0, %s78
      %s81 = sphi 0, %s80
      %s95 = sphi 0, %s81
      %s101 = sphi 0, %s103
      %s104 = sphi 0, %s101
      %s105 = sphi 0, %s104
      %s121 = sphi 0, %s105
    $region4: #{_fused_pipeline.1} parent=1 // loop_header_branch
      %14 = sbr.rel (%p12) target = $region8
    $region5: #{_fused_pipeline.1} parent=1 // loop_body
      %s16 = ssub.s32 %s11, 1
      %s17 = ssub.s32 %s11, 2
      %s24 = sadd.s32 1, %s19
      %p25 = scmp.ge.s32.totalorder %s24, 3
      %s26 = scalar_select %p25, 0, %s24
      %s27 = sadd.s32 1, %s18
      %s28 = scalar_select %p25, %s27, %s18
      %p29 = scmp.ge.s32.totalorder %s28, 1
      %s30 = scalar_select %p29, 0, %s28
      %s31 = ssub.s32 %s18, %s30
      %p32 = scmp.eq.s32.totalorder %s31, 0
      %s34 = sadd.s32 %s33, 1
      %s35 = scalar_select %p32, %s33, %s34
      %p38 = pneg %p32
      %p39 = scmp.eq.s32.totalorder %s11, 2
      %p40 = por %p38, %p39
      %p41 = scmp.ne.s32.totalorder %s33, %s36
      %p42 = scmp.eq.s32.totalorder %s11, 0
      %p43 = por %p41, %p42
      %p44 = scmp.ne.s32.totalorder %s33, %s36
      %p45 = scmp.eq.s32.totalorder %s16, 2
      %p46 = por %p44, %p45
      %p47 = scmp.ne.s32.totalorder %s36, %s37
      %p48 = scmp.eq.s32.totalorder %s16, 0
      %p49 = por %p47, %p48
      %p50 = scmp.ne.s32.totalorder %s36, %s37
      %p51 = scmp.eq.s32.totalorder %s17, 2
      %p52 = por %p50, %p51
      %p54 = scmp.ne.s32.totalorder %s37, %s53
      %p55 = scmp.eq.s32.totalorder %s17, 0
      %p56 = por %p54, %p55
      %s58 = sadd.s32 %s57, 1
      %p61 = scmp.eq.s32.totalorder %s11, 2
      %p62 = scmp.ne.s32.totalorder %s57, %s59
      %p63 = scmp.eq.s32.totalorder %s11, 0
      %p64 = por %p62, %p63
      %p65 = scmp.ne.s32.totalorder %s57, %s59
      %p66 = scmp.eq.s32.totalorder %s16, 2
      %p67 = por %p65, %p66
      %p68 = scmp.ne.s32.totalorder %s59, %s60
      %p69 = scmp.eq.s32.totalorder %s16, 0
      %p70 = por %p68, %p69
      %p71 = scmp.ne.s32.totalorder %s59, %s60
      %p72 = scmp.eq.s32.totalorder %s17, 2
      %p73 = por %p71, %p72
      %p75 = scmp.ne.s32.totalorder %s60, %s74
      %p76 = scmp.eq.s32.totalorder %s17, 0
      %p77 = por %p75, %p76
      %s79 = sadd.s32 %s78, 1
      %p82 = scmp.eq.s32.totalorder %s11, 2
      %p83 = scmp.ne.s32.totalorder %s78, %s80
      %p84 = scmp.eq.s32.totalorder %s11, 0
      %p85 = por %p83, %p84
      %p86 = scmp.ne.s32.totalorder %s78, %s80
      %p87 = scmp.eq.s32.totalorder %s16, 2
      %p88 = por %p86, %p87
      %p89 = scmp.ne.s32.totalorder %s80, %s81
      %p90 = scmp.eq.s32.totalorder %s16, 0
      %p91 = por %p89, %p90
      %p92 = scmp.ne.s32.totalorder %s80, %s81
      %p93 = scmp.eq.s32.totalorder %s17, 2
      %p94 = por %p92, %p93
      %p96 = scmp.ne.s32.totalorder %s81, %s95
      %p97 = scmp.eq.s32.totalorder %s17, 0
      %p98 = por %p96, %p97
      %s99 = ssub.s32 %s18, %s30
      %p100 = scmp.eq.s32.totalorder %s99, 0
      %s102 = sadd.s32 %s101, 1
      %s103 = scalar_select %p100, %s101, %s102
      %p106 = pneg %p100
      %p107 = scmp.eq.s32.totalorder %s11, 2
      %p108 = por %p106, %p107
      %p109 = scmp.ne.s32.totalorder %s101, %s104
      %p110 = scmp.eq.s32.totalorder %s11, 0
      %p111 = por %p109, %p110
      %p112 = scmp.ne.s32.totalorder %s101, %s104
      %p113 = scmp.eq.s32.totalorder %s16, 2
      %p114 = por %p112, %p113
      %p115 = scmp.ne.s32.totalorder %s104, %s105
      %p116 = scmp.eq.s32.totalorder %s16, 0
      %p117 = por %p115, %p116
      %p118 = scmp.ne.s32.totalorder %s104, %s105
      %p119 = scmp.eq.s32.totalorder %s17, 2
      %p120 = por %p118, %p119
      %p122 = scmp.ne.s32.totalorder %s105, %s121
      %p123 = scmp.eq.s32.totalorder %s17, 0
      %p124 = por %p122, %p123
      %p125 = scmp.le.s32.totalorder 1, %s11
      %p126 = scmp.lt.s32.totalorder %s11, 4
      %p127 = pnand %p125, %p126
      %p128 = pneg %p127
      // Predicated region
      $region9: #{_fused_pipeline.1} parent=5 // pred_check
        _
      $region10: #{_fused_pipeline.1} parent=5 // pred_check_branch
        %130 = sbr.rel (%p127) target = $region12
      $region11: #{_fused_pipeline.1} parent=5 // pred_region
        %s131 = ssub.s32 %s11, 1
        // Predicated region
        $region13: #{_fused_pipeline.1} parent=11 // pred_check
          %p132 = pneg %p49
        $region14: #{_fused_pipeline.1} parent=11 // pred_check_branch
          %134 = sbr.rel (%p132) target = $region16
        $region15: #{_fused_pipeline.1} parent=11 // pred_region
          %s135 = smul.u32 2, %s20
          %p136 = scmp.lt.s32.totalorder %s135, 1
          %s137 = scalar_select %p136, %s135, 1
          %s138 = smul.addr %s137, 4
          %s139 = scalar_lea.vmem %s0, %s138
          %s140 = smul.u32 2, %s20
        $region16: #{_fused_pipeline.1} parent=11 // pred_fallthru
          _
        // Predicated region
        $region17: #{_fused_pipeline.1} parent=11 // pred_check
          %p141 = pneg %p70
        $region18: #{_fused_pipeline.1} parent=11 // pred_check_branch
          %143 = sbr.rel (%p141) target = $region20
        $region19: #{_fused_pipeline.1} parent=11 // pred_region
          %s145 = ssub.s32 3072, 3072
          %146 = vsyncadd [#allocation4], %s145
          %s147 = sshll.u32 [#allocation3], 4
          %s148 = int_to_ptr.vmem [resolvable:$true] %s147
          %153 = dma.hbm_to_vmem [thread:$0]  %s1, 3072, %s148, [#allocation4], 64, 64, 4
        $region20: #{_fused_pipeline.1} parent=11 // pred_fallthru
          _
        // Predicated region
        $region21: #{_fused_pipeline.1} parent=11 // pred_check
          %p154 = pneg %p91
        $region22: #{_fused_pipeline.1} parent=11 // pred_check_branch
          %156 = sbr.rel (%p154) target = $region24
        $region23: #{_fused_pipeline.1} parent=11 // pred_region
          _
        $region24: #{_fused_pipeline.1} parent=11 // pred_fallthru
          _
      $region12: #{_fused_pipeline.1} parent=5 // pred_fallthru
        _
      %p157 = scmp.lt.s32.totalorder %s11, 3
      // Predicated region
      $region25: #{_fused_pipeline.1} parent=5 // pred_check
        %p158 = pneg %p157
      $region26: #{_fused_pipeline.1} parent=5 // pred_check_branch
        %160 = sbr.rel (%p158) target = $region28
      $region27: #{_fused_pipeline.1} parent=5 // pred_region
        _
      $region28: #{_fused_pipeline.1} parent=5 // pred_fallthru
        _
      %p161 = scmp.le.s32.totalorder 1, %s11
      %p162 = scmp.lt.s32.totalorder %s11, 4
      %p163 = pnand %p161, %p162
      %p164 = pneg %p163
      // Predicated region
      $region29: #{_fused_pipeline.1} parent=5 // pred_check
        _
      $region30: #{_fused_pipeline.1} parent=5 // pred_check_branch
        %166 = sbr.rel (%p163) target = $region32
      $region31: #{_fused_pipeline.1} parent=5 // pred_region
        %s167 = ssub.s32 %s11, 1
        // Predicated region
        $region33: #{_fused_pipeline.1} parent=31 // pred_check
          %p168 = pneg %p70
        $region34: #{_fused_pipeline.1} parent=31 // pred_check_branch
          %170 = sbr.rel (%p168) target = $region36
        $region35: #{_fused_pipeline.1} parent=31 // pred_region
          %171 = dma.done [#allocation4], 3072
        $region36: #{_fused_pipeline.1} parent=31 // pred_fallthru
          _
        %s172 = smul.u32 2, %s20
        %p173 = scmp.lt.s32.totalorder %s172, 1
        %s174 = scalar_select %p173, %s172, 1
        %s175 = smul.addr %s174, 4
        %s176 = scalar_lea.vmem %s0, %s175
        %p177 = pneg %p49
        %p178 = pneg %p46
        %p179 = pneg %p70
        %p180 = pneg %p67
        %p181 = pneg %p91
        %p182 = pneg %p88
        %p183 = pneg %p117
        %p184 = pneg %p114
        %s185 = smul.u32 2, %s20
        %p186 = scmp.lt.s32.totalorder %s185, 1
        %s187 = scalar_select %p186, %s185, 1
        %s188 = smul.addr %s187, 4
        %s189 = scalar_lea.vmem %s0, %s188
        %s190 = smul.u32 2, %s20
        %s191 = smul.u32 2, %s20
        %p193 = scmp.eq.s32.totalorder %s21, 0
        // Predicated region
        $region37: #{_fused_pipeline.1} parent=31 // pred_check
          %p194 = pneg %p193
        $region38: #{_fused_pipeline.1} parent=31 // pred_check_branch
          %196 = sbr.rel (%p194) target = $region40
        $region39: #{_fused_pipeline.1} parent=31 // pred_region
          %v197 = vld [vmem:[%s189] sm:$0xf]
          %v198 = vld [vmem:[%s189 + $0x4] sm:$0xf]
          %v201 = vunpack.c.l.b16 %v197
          %v202 = vunpack.c.l.b16 %v198
          %v203 = vpack.c.b16 %v202, %v201
          %205 = vst [vmem:[#allocation2] sm:$0xff] %v203
        $region40: #{_fused_pipeline.1} parent=31 // pred_fallthru
          _
        %s206 = smul.u32 %s21, 16
        %s207 = smul.addr %s206, 4
        %s208 = scalar_lea.vmem [#allocation3], %s207
        %v209 = vld [vmem:[%s208] sm:$0xf]
        %v210 = vld [vmem:[%s208 + $0x4] sm:$0xf]
        %v211 = vld [vmem:[%s208 + $0x8] sm:$0xf]
        %v212 = vld [vmem:[%s208 + $0xc] sm:$0xf]
        %v213 = vld [vmem:[%s208 + $0x10] sm:$0xf]
        %v214 = vld [vmem:[%s208 + $0x14] sm:$0xf]
        %v215 = vld [vmem:[%s208 + $0x18] sm:$0xf]
        %v216 = vld [vmem:[%s208 + $0x1c] sm:$0xf]
        %v217 = vld [vmem:[%s208 + $0x20] sm:$0xf]
        %v218 = vld [vmem:[%s208 + $0x24] sm:$0xf]
        %v219 = vld [vmem:[%s208 + $0x28] sm:$0xf]
        %v220 = vld [vmem:[%s208 + $0x2c] sm:$0xf]
        %v221 = vld [vmem:[%s208 + $0x30] sm:$0xf]
        %v222 = vld [vmem:[%s208 + $0x34] sm:$0xf]
        %v223 = vld [vmem:[%s208 + $0x38] sm:$0xf]
        %v224 = vld [vmem:[%s208 + $0x3c] sm:$0xf]
        %s225 = scalar_lea.vmem %s2, %s21
        %v226 = vld [vmem:[%s225] sm:$0x1]
        %v227 = vld [vmem:[#allocation2] sm:$0xff]
        %v229 = vlaneseq
        %v230 = vshrl.u32 %v229, 7
        %v231 = vsub.s32 0, %v230
        %v232 = vrot.slane %v226, %v231
        %v250 = vunpack.c.l.b16 %v209
        %v251 = vunpack.c.l.b16 %v210
        %v252 = vunpack.c.l.b16 %v211
        %v253 = vunpack.c.l.b16 %v212
        %v254 = vunpack.c.l.b16 %v213
        %v255 = vunpack.c.l.b16 %v214
        %v256 = vunpack.c.l.b16 %v215
        %v257 = vunpack.c.l.b16 %v216
        %v258 = vunpack.c.l.b16 %v217
        %v259 = vunpack.c.l.b16 %v218
        %v260 = vunpack.c.l.b16 %v219
        %v261 = vunpack.c.l.b16 %v220
        %v262 = vunpack.c.l.b16 %v221
        %v263 = vunpack.c.l.b16 %v222
        %v264 = vunpack.c.l.b16 %v223
        %v265 = vunpack.c.l.b16 %v224
        %v266 = vpack.c.b16 %v251, %v250
        %v267 = vpack.c.b16 %v253, %v252
        %v268 = vpack.c.b16 %v255, %v254
        %v269 = vpack.c.b16 %v257, %v256
        %v270 = vpack.c.b16 %v259, %v258
        %v271 = vpack.c.b16 %v261, %v260
        %v272 = vpack.c.b16 %v263, %v262
        %v273 = vpack.c.b16 %v265, %v264
        %282 = vmatprep.subr.bf16.mxu0 0
        %283 = vmatpush1.bf16.msra.mxu0 %v266
        %284 = vmatprep.subr.bf16.mxu0 0
        %285 = vmatpush1.bf16.msra.mxu0 %v267
        %286 = vmatprep.subr.bf16.mxu0 0
        %287 = vmatpush1.bf16.msra.mxu0 %v268
        %288 = vmatprep.subr.bf16.mxu0 0
        %289 = vmatpush1.bf16.msra.mxu0 %v269
        %290 = vmatprep.subr.bf16.mxu0 0
        %291 = vmatpush1.bf16.msra.mxu0 %v270
        %292 = vmatprep.subr.bf16.mxu0 0
        %293 = vmatpush1.bf16.msra.mxu0 %v271
        %294 = vmatprep.subr.bf16.mxu0 0
        %295 = vmatpush1.bf16.msra.mxu0 %v272
        %296 = vmatprep.subr.bf16.mxu0 0
        %297 = vmatpush1.bf16.msra.mxu0 %v273
        %298 = vmatprep.subr.bf16.mxu0 0
        %299 = vmatpush1.bf16.msra.mxu0 0
        %300 = vmatprep.subr.bf16.mxu0 0
        %301 = vmatpush1.bf16.msra.mxu0 0
        %302 = vmatprep.subr.bf16.mxu0 0
        %303 = vmatpush1.bf16.msra.mxu0 0
        %304 = vmatprep.subr.bf16.mxu0 0
        %305 = vmatpush1.bf16.msra.mxu0 0
        %306 = vmatprep.subr.bf16.mxu0 0
        %307 = vmatpush1.bf16.msra.mxu0 0
        %308 = vmatprep.subr.bf16.mxu0 0
        %309 = vmatpush1.bf16.msra.mxu0 0
        %310 = vmatprep.subr.bf16.mxu0 0
        %311 = vmatpush1.bf16.msra.mxu0 0
        %312 = vmatprep.subr.bf16.mxu0 0
        %313 = vmatpush1.bf16.msra.mxu0 0
        %314 = vmatprep.mubr.bf16.mxu0 0
        %315 = vmatmul.mubr.bf16.gmra.mrb[0].mxu0 %v227
        %v316 = vpop.f32.mrb[0].mxu0
        %v317 = vadd.f32 %v232, %v316
        %v318 = vpop.f32.mrb[0].mxu0
        %v319 = vpop.f32.mrb[0].mxu0
        %v320 = vadd.f32 %v232, %v319
        %v321 = vpop.f32.mrb[0].mxu0
        %322 = vdwg.mxu0
        %v323 = vmax.f32 %v317, 0.0
        %v324 = vmax.f32 %v320, 0.0
        %p325 = scmp.eq.s32.totalorder %s21, 2
        // Predicated region
        $region41: #{_fused_pipeline.1} parent=31 // pred_check
          %p326 = pneg %p325
        $region42: #{_fused_pipeline.1} parent=31 // pred_check_branch
          %328 = sbr.rel (%p326) target = $region44
        $region43: #{_fused_pipeline.1} parent=31 // pred_region
          %329 = vst [vmem:[#allocation6] sm:$0xff] %v323
          %330 = vst [vmem:[#allocation6 + $0x8] sm:$0xff] %v324
        $region44: #{_fused_pipeline.1} parent=31 // pred_fallthru
          _
        %p331 = scmp.lt.s32.totalorder %s21, 2
        // Predicated region
        $region45: #{_fused_pipeline.1} parent=31 // pred_check
          %p332 = pneg %p331
        $region46: #{_fused_pipeline.1} parent=31 // pred_check_branch
          %334 = sbr.rel (%p332) target = $region48
        $region47: #{_fused_pipeline.1} parent=31 // pred_region
          %v335 = vpack.c.bf16 %v324, %v323
          %336 = vst [vmem:[#allocation2] sm:$0xff] %v335
        $region48: #{_fused_pipeline.1} parent=31 // pred_fallthru
          _
        // Predicated region
        $region49: #{_fused_pipeline.1} parent=31 // pred_check
          %p337 = pneg %p114
        $region50: #{_fused_pipeline.1} parent=31 // pred_check_branch
          %339 = sbr.rel (%p337) target = $region52
        $region51: #{_fused_pipeline.1} parent=31 // pred_region
          %s340 = smul.u32 2, %s20
          %s342 = ssub.s32 256, 256
          %343 = vsyncadd [#allocation5], %s342
          %s344 = smul.addr %s340, 128
          %s345 = scalar_lea.hbm %s3, %s344
          %s346 = sshll.u32 [#allocation6], 4
          %s347 = int_to_ptr.vmem [resolvable:$true] %s346
          %352 = dma.vmem_to_hbm [thread:$0]  %s347, 256, %s345, [#allocation5], 128, 128, 8
        $region52: #{_fused_pipeline.1} parent=31 // pred_fallthru
          _
        // Predicated region
        $region53: #{_fused_pipeline.1} parent=31 // pred_check
          %p353 = pneg %p114
        $region54: #{_fused_pipeline.1} parent=31 // pred_check_branch
          %355 = sbr.rel (%p353) target = $region56
        $region55: #{_fused_pipeline.1} parent=31 // pred_region
          %356 = dma.done [#allocation5], 256
        $region56: #{_fused_pipeline.1} parent=31 // pred_fallthru
          _
      $region32: #{_fused_pipeline.1} parent=5 // pred_fallthru
        _
      %p357 = scmp.le.s32.totalorder 2, %s11
      // Predicated region
      $region57: #{_fused_pipeline.1} parent=5 // pred_check
        %p358 = pneg %p357
      $region58: #{_fused_pipeline.1} parent=5 // pred_check_branch
        %360 = sbr.rel (%p358) target = $region60
      $region59: #{_fused_pipeline.1} parent=5 // pred_region
        %s361 = ssub.s32 %s11, 2
      $region60: #{_fused_pipeline.1} parent=5 // pred_fallthru
        _
    $region6: #{_fused_pipeline.1} parent=1 // loop_footer
      %s15 = sadd.s32 1, %s11
    $region7: #{_fused_pipeline.1} parent=1 // loop_footer_branch
      %10 = sbr.rel target = $region3
    $region8: #{_fused_pipeline.1} parent=1 // loop_exit
      _
    %362 = vsyncpa [#allocation4], 1
    %s363 = scalar_lea.sflag [#allocation4], 1
    %364 = vsyncpa %s363, 1
    %365 = vsyncpa [#allocation5], 1
    %s366 = scalar_lea.sflag [#allocation5], 1
    %367 = vsyncpa %s366, 1

</llo_original>
